<compile_context>
chip_gen: v7x
topology: tpu7x:2x2x1
jax: 0.10.0
libtpu: 0.0.40
codegen_flags: <defaults>
</compile_context>

<pallas_src>
import jax
import jax.numpy as jnp
from jax.experimental import pallas as pl
from jax.experimental.pallas import tpu as pltpu

_BN_EPS = 1e-5
_MASK_W = 8.0       # get_mask(w=8)
_MASK_SIGMA = 0.5   # get_mask(sigma=0.5)


# ------------------------------ fused kernel --------------------------------


def soft_fused_kernel(x_ref, adj_ref, gcam_ref, w12t_ref, b12_ref, head_ref,
                      big_ref, small_ref):
    f32 = jnp.float32
    x = x_ref[...]          # (M, D)
    adj = adj_ref[...]      # (D, D)
    gcam = gcam_ref[...]    # (D, D), already symmetrized (mw + mw.T) at init
    m, d = x.shape          # static

    # ---------------- mask / masked adjacency / attention adjacency ----------
    gmin = jnp.min(gcam)
    gmax = jnp.max(gcam)
    # One scalar reciprocal instead of a full (D, D) divide; eps guards the
    # degenerate constant-gcam case (0/0 -> NaN in the reference).
    inv_range = 1.0 / jnp.maximum(gmax - gmin, 1e-12)
    mask = jax.nn.sigmoid(_MASK_W * ((gcam - gmin) * inv_range - _MASK_SIGMA))
    masked = adj - adj * mask          # mask_image(adj, mask)
    a_att = adj - masked               # A_att (same FP order as the reference)

    adjs = (adj, masked, a_att)        # branch 0 / 1 / 2 adjacencies

    # ---------------- packed parameters (static, tile-aligned slices) --------
    w12t = w12t_ref[...]
    w1t = w12t[0:d, :]                 # gcn1 weight, pre-transposed
    w2t = w12t[d:2 * d, :]             # gcn2 weight, pre-transposed
    b12 = b12_ref[...]
    b1 = b12[0:1, :]
    b2 = b12[1:2, :]
    head = head_ref[...]
    w_eff = head[0:d, :]               # folded pred_model @ score_cl weight
    b_eff = head[d:d + 1, :]           # folded bias

    def batchnorm3(h):
        # BatchNorm1d, training mode, gamma=1/beta=0, biased variance.
        # One reduction pass for all 3 branches: (3M, D) -> (3, M, D), reduce
        # over the M axis (M is a whole sublane tile, so the reshape is free).
        h3 = h.reshape(3, m, d)
        mean = jnp.mean(h3, axis=1, keepdims=True)
        var = jnp.mean((h3 - mean) ** 2, axis=1, keepdims=True)
        return (h3 - mean) * jax.lax.rsqrt(var + _BN_EPS)      # (3, M, D)

    # ---------------- hop 1: column-fused adjacency GEMM ---------------------
    # All branches propagate the same x, so one (M, D) x (D, 3D) dot.
    cat_adj = jnp.concatenate(adjs, axis=1)                       # (D, 3D)
    p1 = jnp.dot(x, cat_adj, preferred_element_type=f32)          # (M, 3D)
    p1s = jnp.concatenate(                                        # -> (3M, D)
        [p1[:, 0:d], p1[:, d:2 * d], p1[:, 2 * d:3 * d]], axis=0)
    h1 = jnp.maximum(jnp.dot(p1s, w1t, preferred_element_type=f32) + b1, 0.0)
    c1 = batchnorm3(h1)                                           # (3, M, D)

    # ---------------- hop 2: per-branch adjacency -----------------------------
    p2 = jnp.concatenate(
        [jnp.dot(c1[i], adjs[i], preferred_element_type=f32) for i in range(3)],
        axis=0)                                                   # (3M, D)
    h2 = jnp.maximum(jnp.dot(p2, w2t, preferred_element_type=f32) + b2, 0.0)
    c2 = batchnorm3(h2)                                           # (3, M, D)

    flag = c2[2]                                                  # branch 2 out

    # ---------------- folded head (branches 0 & 1 only) ----------------------
    ch = jnp.concatenate([c2[0], c2[1]], axis=0)                  # (2M, D)
    logits = jnp.dot(ch, w_eff, preferred_element_type=f32) + b_eff
    logits0 = logits[0:m]              # branch 0 -> logits + softmax
    logits1 = logits[m:2 * m]          # branch 1 -> sigmoid only
    mx = jnp.max(logits0, axis=1, keepdims=True)
    e = jnp.exp(logits0 - mx)
    smax = e * pl.reciprocal(jnp.sum(e, axis=1, keepdims=True), approx=True)
    p_att = jax.nn.sigmoid(logits1)

    # ---------------- packed output slabs (2 DMAs instead of 6) --------------
    big_ref[...] = jnp.concatenate([flag, a_att, mask], axis=0)        # (M+2D, D)
    small_ref[...] = jnp.concatenate([logits0, smax, p_att], axis=0)   # (3M, nC)


# -------------------------------- wrapper ------------------------------------


def init_params(key, input_shape, n_class):
    """Initialize and PRE-PACK parameters in kernel-ready form.

    Transposes, gcam symmetrization and the pred_model∘score_cl fold are done
    once here, so the per-call forward has zero parameter massaging.
    """
    D = input_shape
    D2 = D // 2
    ks = jax.random.split(key, 9)
    mw = 0.01 * jax.random.normal(ks[0], (D, D), jnp.float32)
    gcn1_w = 0.05 * jax.random.normal(ks[1], (D, D), jnp.float32)
    gcn1_b = 0.05 * jax.random.normal(ks[2], (1, D), jnp.float32)
    gcn2_w = 0.05 * jax.random.normal(ks[3], (D, D), jnp.float32)
    gcn2_b = 0.05 * jax.random.normal(ks[4], (1, D), jnp.float32)
    pred_w = 0.05 * jax.random.normal(ks[5], (D2, D), jnp.float32)
    pred_b = 0.05 * jax.random.normal(ks[6], (1, D2), jnp.float32)
    score_w = 0.05 * jax.random.normal(ks[7], (n_class, D2), jnp.float32)
    score_b = 0.05 * jax.random.normal(ks[8], (1, n_class), jnp.float32)

    w_eff = pred_w.T @ score_w.T                 # (D, nClass)
    b_eff = pred_b @ score_w.T + score_b         # (1, nClass)
    return {
        "gcam": mw + mw.T,                                        # (D, D)
        "w12t": jnp.concatenate([gcn1_w.T, gcn2_w.T], axis=0),    # (2D, D)
        "b12": jnp.concatenate([gcn1_b, gcn2_b], axis=0),         # (2, D)
        "head": jnp.concatenate([w_eff, b_eff], axis=0),          # (D+1, nClass)
    }


@jax.jit
def soft_forward(x, adj, params):
    M, D = x.shape
    nclass = params["head"].shape[1]

    out_shape = (
        jax.ShapeDtypeStruct((M + 2 * D, D), jnp.float32),     # [flag; A_att; mask]
        jax.ShapeDtypeStruct((3 * M, nclass), jnp.float32),    # [logits; softmax; sigmoid]
    )

    # Advisory cost hint: tiny, launch-dominated kernel.
    flops = int(24 * M * D * D + 4 * M * D * nclass)
    transcendentals = int(D * D + 2 * M * nclass + 6 * D)
    in_elems = M * D + 4 * D * D + 2 * D + (D + 1) * nclass
    out_elems = (M + 2 * D) * D + 3 * M * nclass
    cost = pl.CostEstimate(flops=flops, transcendentals=transcendentals,
                           bytes_accessed=int(4 * (in_elems + out_elems)))

    vmem = pl.BlockSpec(memory_space=pltpu.MemorySpace.VMEM)
    big, small = pl.pallas_call(
        soft_fused_kernel,
        out_shape=out_shape,
        in_specs=[vmem] * 6,
        out_specs=(vmem, vmem),
        cost_estimate=cost,
    )(x, adj, params["gcam"], params["w12t"], params["b12"], params["head"])

    flag = big[0:M]
    a_att = big[M:M + D]
    mask = big[M + D:M + 2 * D]
    logits = small[0:M]
    smax = small[M:2 * M]
    p_att = small[2 * M:3 * M]

    # Original module returns:
    # (flag, pred_cluster, pseudo_label, A_att, pred, pred, pred_att, mask)
    # with pseudo_label == pred == softmax(pred_cluster).
    return (flag, logits, smax, a_att, smax, smax, p_att, mask)


if __name__ == "__main__":
    INPUT_SHAPE = 32   # D (even, so input_shape2 = D // 2)
    N_CLASS = 4
    M = 8              # batch of samples/nodes

    key = jax.random.PRNGKey(0)
    k_x, k_adj, k_p = jax.random.split(key, 3)
    x = jax.random.normal(k_x, (M, INPUT_SHAPE), jnp.float32)
    adj = jax.random.normal(k_adj, (INPUT_SHAPE, INPUT_SHAPE), jnp.float32)
    params = init_params(k_p, INPUT_SHAPE, N_CLASS)

    outs = soft_forward(x, adj, params)
    jax.block_until_ready(outs)

    flag, pred_cluster, pseudo_label, a_att, pred, pred2, pred_att, mask = outs
    assert flag.shape == (M, INPUT_SHAPE)
    assert pred_cluster.shape == (M, N_CLASS)
    assert pseudo_label.shape == (M, N_CLASS)
    assert a_att.shape == (INPUT_SHAPE, INPUT_SHAPE)
    assert pred.shape == (M, N_CLASS)
    assert pred_att.shape == (M, N_CLASS)
    assert mask.shape == (INPUT_SHAPE, INPUT_SHAPE)
    assert bool(jnp.all(jnp.isfinite(flag)))
    assert bool(jnp.all(jnp.isfinite(pseudo_label)))
    assert bool(jnp.all(jnp.isfinite(pred_att)))
    # softmax rows must sum to ~1 (approx=True reciprocal has ~1e-3 rel error)
    assert bool(jnp.all(jnp.abs(jnp.sum(pseudo_label, axis=1) - 1.0) < 1e-2))

    print("KERNEL_OK")
</pallas_src>

<mosaic_0001>
module attributes {stable_mosaic.version = 11 : i64} {
  func.func @soft_fused_kernel(%arg0: memref<8x32xf32, #tpu.memory_space<vmem>>, %arg1: memref<32x32xf32, #tpu.memory_space<vmem>>, %arg2: memref<32x32xf32, #tpu.memory_space<vmem>>, %arg3: memref<64x32xf32, #tpu.memory_space<vmem>>, %arg4: memref<2x32xf32, #tpu.memory_space<vmem>>, %arg5: memref<33x4xf32, #tpu.memory_space<vmem>>, %arg6: memref<72x32xf32, #tpu.memory_space<vmem>>, %arg7: memref<24x4xf32, #tpu.memory_space<vmem>>) attributes {dimension_semantics = [], scalar_prefetch = 0 : i64, scratch_operands = 0 : i64, tpu.core_type = #tpu.core_type<tc>} {
    %c0 = arith.constant 0 : index
    %c0_0 = arith.constant 0 : index
    %0 = vector.load %arg0[%c0, %c0_0] : memref<8x32xf32, #tpu.memory_space<vmem>>, vector<8x32xf32>
    %c0_1 = arith.constant 0 : index
    %c0_2 = arith.constant 0 : index
    %1 = vector.load %arg1[%c0_1, %c0_2] : memref<32x32xf32, #tpu.memory_space<vmem>>, vector<32x32xf32>
    %c0_3 = arith.constant 0 : index
    %c0_4 = arith.constant 0 : index
    %2 = vector.load %arg2[%c0_3, %c0_4] : memref<32x32xf32, #tpu.memory_space<vmem>>, vector<32x32xf32>
    %3 = vector.shape_cast %2 : vector<32x32xf32> to vector<1x32x32xf32>
    %cst = arith.constant dense<0x7F800000> : vector<1xf32>
    %4 = vector.multi_reduction <minimumf>, %3, %cst [1, 2] : vector<1x32x32xf32> to vector<1xf32>
    %5 = vector.shape_cast %4 : vector<1xf32> to vector<1x1x1xf32>
    %6 = vector.extract %5[0, 0, 0] : f32 from vector<1x1x1xf32>
    %7 = vector.shape_cast %2 : vector<32x32xf32> to vector<1x32x32xf32>
    %cst_5 = arith.constant dense<0xFF800000> : vector<1xf32>
    %8 = vector.multi_reduction <maximumf>, %7, %cst_5 [1, 2] : vector<1x32x32xf32> to vector<1xf32>
    %9 = vector.shape_cast %8 : vector<1xf32> to vector<1x1x1xf32>
    %10 = vector.extract %9[0, 0, 0] : f32 from vector<1x1x1xf32>
    %11 = arith.subf %10, %6 : f32
    %cst_6 = arith.constant 9.99999996E-13 : f32
    %12 = arith.maximumf %11, %cst_6 : f32
    %cst_7 = arith.constant 1.000000e+00 : f32
    %13 = arith.divf %cst_7, %12 : f32
    %14 = vector.broadcast %6 : f32 to vector<32x32xf32>
    %15 = arith.subf %2, %14 : vector<32x32xf32>
    %16 = vector.broadcast %13 : f32 to vector<32x32xf32>
    %17 = arith.mulf %15, %16 : vector<32x32xf32>
    %cst_8 = arith.constant 5.000000e-01 : f32
    %18 = vector.broadcast %cst_8 : f32 to vector<32x32xf32>
    %19 = arith.subf %17, %18 : vector<32x32xf32>
    %cst_9 = arith.constant 8.000000e+00 : f32
    %20 = vector.broadcast %cst_9 : f32 to vector<32x32xf32>
    %21 = arith.mulf %20, %19 : vector<32x32xf32>
    %22 = arith.negf %21 : vector<32x32xf32>
    %23 = math.exp %22 : vector<32x32xf32>
    %cst_10 = arith.constant 1.000000e+00 : f32
    %24 = vector.broadcast %cst_10 : f32 to vector<32x32xf32>
    %25 = arith.addf %24, %23 : vector<32x32xf32>
    %26 = arith.divf %24, %25 : vector<32x32xf32>
    %27 = arith.mulf %1, %26 : vector<32x32xf32>
    %28 = arith.subf %1, %27 : vector<32x32xf32>
    %29 = arith.subf %1, %28 : vector<32x32xf32>
    %c0_11 = arith.constant 0 : index
    %c0_12 = arith.constant 0 : index
    %30 = vector.load %arg3[%c0_11, %c0_12] : memref<64x32xf32, #tpu.memory_space<vmem>>, vector<64x32xf32>
    %31 = vector.extract_strided_slice %30 {offsets = [0, 0], sizes = [32, 32], strides = [1, 1]} : vector<64x32xf32> to vector<32x32xf32>
    %32 = vector.extract_strided_slice %30 {offsets = [32, 0], sizes = [32, 32], strides = [1, 1]} : vector<64x32xf32> to vector<32x32xf32>
    %c0_13 = arith.constant 0 : index
    %c0_14 = arith.constant 0 : index
    %33 = vector.load %arg4[%c0_13, %c0_14] : memref<2x32xf32, #tpu.memory_space<vmem>>, vector<2x32xf32>
    %34 = vector.extract_strided_slice %33 {offsets = [0, 0], sizes = [1, 32], strides = [1, 1]} : vector<2x32xf32> to vector<1x32xf32>
    %35 = vector.extract_strided_slice %33 {offsets = [1, 0], sizes = [1, 32], strides = [1, 1]} : vector<2x32xf32> to vector<1x32xf32>
    %c0_15 = arith.constant 0 : index
    %c0_16 = arith.constant 0 : index
    %36 = vector.load %arg5[%c0_15, %c0_16] : memref<33x4xf32, #tpu.memory_space<vmem>>, vector<33x4xf32>
    %37 = vector.extract_strided_slice %36 {offsets = [0, 0], sizes = [32, 4], strides = [1, 1]} : vector<33x4xf32> to vector<32x4xf32>
    %38 = vector.extract_strided_slice %36 {offsets = [32, 0], sizes = [1, 4], strides = [1, 1]} : vector<33x4xf32> to vector<1x4xf32>
    %39 = tpu.concatenate %1, %28, %29 in 1 : vector<32x32xf32>, vector<32x32xf32>, vector<32x32xf32> -> vector<32x96xf32>
    %cst_17 = arith.constant dense<0.000000e+00> : vector<8x96xf32>
    %40 = tpu.matmul %0, %39, %cst_17 {dimension_numbers = #tpu.dot_dimension_numbers<[1], [0], [0], [1], [0, 0, 1, 1], [], []>} : vector<8x32xf32>, vector<32x96xf32>, vector<8x96xf32> -> vector<8x96xf32>
    %41 = vector.extract_strided_slice %40 {offsets = [0, 0], sizes = [8, 32], strides = [1, 1]} : vector<8x96xf32> to vector<8x32xf32>
    %42 = vector.extract_strided_slice %40 {offsets = [0, 32], sizes = [8, 32], strides = [1, 1]} : vector<8x96xf32> to vector<8x32xf32>
    %43 = vector.extract_strided_slice %40 {offsets = [0, 64], sizes = [8, 32], strides = [1, 1]} : vector<8x96xf32> to vector<8x32xf32>
    %44 = tpu.concatenate %41, %42, %43 in 0 : vector<8x32xf32>, vector<8x32xf32>, vector<8x32xf32> -> vector<24x32xf32>
    %cst_18 = arith.constant dense<0.000000e+00> : vector<24x32xf32>
    %45 = tpu.matmul %44, %31, %cst_18 {dimension_numbers = #tpu.dot_dimension_numbers<[1], [0], [0], [1], [0, 0, 1, 1], [], []>} : vector<24x32xf32>, vector<32x32xf32>, vector<24x32xf32> -> vector<24x32xf32>
    %46 = vector.broadcast %34 : vector<1x32xf32> to vector<24x32xf32>
    %47 = arith.addf %45, %46 : vector<24x32xf32>
    %cst_19 = arith.constant 0.000000e+00 : f32
    %48 = vector.broadcast %cst_19 : f32 to vector<24x32xf32>
    %49 = arith.maximumf %47, %48 : vector<24x32xf32>
    %50 = vector.shape_cast %49 : vector<24x32xf32> to vector<3x8x32xf32>
    %cst_20 = arith.constant dense<0.000000e+00> : vector<3x32xf32>
    %51 = vector.multi_reduction <add>, %50, %cst_20 [1] : vector<3x8x32xf32> to vector<3x32xf32>
    %52 = vector.shape_cast %51 : vector<3x32xf32> to vector<3x1x32xf32>
    %cst_21 = arith.constant 8.000000e+00 : f32
    %53 = vector.broadcast %cst_21 : f32 to vector<3x1x32xf32>
    %54 = arith.divf %52, %53 : vector<3x1x32xf32>
    %55 = vector.broadcast %54 : vector<3x1x32xf32> to vector<3x8x32xf32>
    %56 = arith.subf %50, %55 : vector<3x8x32xf32>
    %57 = arith.mulf %56, %56 : vector<3x8x32xf32>
    %cst_22 = arith.constant dense<0.000000e+00> : vector<3x32xf32>
    %58 = vector.multi_reduction <add>, %57, %cst_22 [1] : vector<3x8x32xf32> to vector<3x32xf32>
    %59 = vector.shape_cast %58 : vector<3x32xf32> to vector<3x1x32xf32>
    %cst_23 = arith.constant 8.000000e+00 : f32
    %60 = vector.broadcast %cst_23 : f32 to vector<3x1x32xf32>
    %61 = arith.divf %59, %60 : vector<3x1x32xf32>
    %62 = vector.broadcast %54 : vector<3x1x32xf32> to vector<3x8x32xf32>
    %63 = arith.subf %50, %62 : vector<3x8x32xf32>
    %cst_24 = arith.constant 9.99999974E-6 : f32
    %64 = vector.broadcast %cst_24 : f32 to vector<3x1x32xf32>
    %65 = arith.addf %61, %64 : vector<3x1x32xf32>
    %66 = math.rsqrt %65 : vector<3x1x32xf32>
    %67 = vector.broadcast %66 : vector<3x1x32xf32> to vector<3x8x32xf32>
    %68 = arith.mulf %63, %67 : vector<3x8x32xf32>
    %69 = vector.extract_strided_slice %68 {offsets = [0, 0, 0], sizes = [1, 8, 32], strides = [1, 1, 1]} : vector<3x8x32xf32> to vector<1x8x32xf32>
    %70 = vector.shape_cast %69 : vector<1x8x32xf32> to vector<8x32xf32>
    %cst_25 = arith.constant dense<0.000000e+00> : vector<8x32xf32>
    %71 = tpu.matmul %70, %1, %cst_25 {dimension_numbers = #tpu.dot_dimension_numbers<[1], [0], [0], [1], [0, 0, 1, 1], [], []>} : vector<8x32xf32>, vector<32x32xf32>, vector<8x32xf32> -> vector<8x32xf32>
    %72 = vector.extract_strided_slice %68 {offsets = [1, 0, 0], sizes = [1, 8, 32], strides = [1, 1, 1]} : vector<3x8x32xf32> to vector<1x8x32xf32>
    %73 = vector.shape_cast %72 : vector<1x8x32xf32> to vector<8x32xf32>
    %cst_26 = arith.constant dense<0.000000e+00> : vector<8x32xf32>
    %74 = tpu.matmul %73, %28, %cst_26 {dimension_numbers = #tpu.dot_dimension_numbers<[1], [0], [0], [1], [0, 0, 1, 1], [], []>} : vector<8x32xf32>, vector<32x32xf32>, vector<8x32xf32> -> vector<8x32xf32>
    %75 = vector.extract_strided_slice %68 {offsets = [2, 0, 0], sizes = [1, 8, 32], strides = [1, 1, 1]} : vector<3x8x32xf32> to vector<1x8x32xf32>
    %76 = vector.shape_cast %75 : vector<1x8x32xf32> to vector<8x32xf32>
    %cst_27 = arith.constant dense<0.000000e+00> : vector<8x32xf32>
    %77 = tpu.matmul %76, %29, %cst_27 {dimension_numbers = #tpu.dot_dimension_numbers<[1], [0], [0], [1], [0, 0, 1, 1], [], []>} : vector<8x32xf32>, vector<32x32xf32>, vector<8x32xf32> -> vector<8x32xf32>
    %78 = tpu.concatenate %71, %74, %77 in 0 : vector<8x32xf32>, vector<8x32xf32>, vector<8x32xf32> -> vector<24x32xf32>
    %cst_28 = arith.constant dense<0.000000e+00> : vector<24x32xf32>
    %79 = tpu.matmul %78, %32, %cst_28 {dimension_numbers = #tpu.dot_dimension_numbers<[1], [0], [0], [1], [0, 0, 1, 1], [], []>} : vector<24x32xf32>, vector<32x32xf32>, vector<24x32xf32> -> vector<24x32xf32>
    %80 = vector.broadcast %35 : vector<1x32xf32> to vector<24x32xf32>
    %81 = arith.addf %79, %80 : vector<24x32xf32>
    %cst_29 = arith.constant 0.000000e+00 : f32
    %82 = vector.broadcast %cst_29 : f32 to vector<24x32xf32>
    %83 = arith.maximumf %81, %82 : vector<24x32xf32>
    %84 = vector.shape_cast %83 : vector<24x32xf32> to vector<3x8x32xf32>
    %cst_30 = arith.constant dense<0.000000e+00> : vector<3x32xf32>
    %85 = vector.multi_reduction <add>, %84, %cst_30 [1] : vector<3x8x32xf32> to vector<3x32xf32>
    %86 = vector.shape_cast %85 : vector<3x32xf32> to vector<3x1x32xf32>
    %cst_31 = arith.constant 8.000000e+00 : f32
    %87 = vector.broadcast %cst_31 : f32 to vector<3x1x32xf32>
    %88 = arith.divf %86, %87 : vector<3x1x32xf32>
    %89 = vector.broadcast %88 : vector<3x1x32xf32> to vector<3x8x32xf32>
    %90 = arith.subf %84, %89 : vector<3x8x32xf32>
    %91 = arith.mulf %90, %90 : vector<3x8x32xf32>
    %cst_32 = arith.constant dense<0.000000e+00> : vector<3x32xf32>
    %92 = vector.multi_reduction <add>, %91, %cst_32 [1] : vector<3x8x32xf32> to vector<3x32xf32>
    %93 = vector.shape_cast %92 : vector<3x32xf32> to vector<3x1x32xf32>
    %cst_33 = arith.constant 8.000000e+00 : f32
    %94 = vector.broadcast %cst_33 : f32 to vector<3x1x32xf32>
    %95 = arith.divf %93, %94 : vector<3x1x32xf32>
    %96 = vector.broadcast %88 : vector<3x1x32xf32> to vector<3x8x32xf32>
    %97 = arith.subf %84, %96 : vector<3x8x32xf32>
    %cst_34 = arith.constant 9.99999974E-6 : f32
    %98 = vector.broadcast %cst_34 : f32 to vector<3x1x32xf32>
    %99 = arith.addf %95, %98 : vector<3x1x32xf32>
    %100 = math.rsqrt %99 : vector<3x1x32xf32>
    %101 = vector.broadcast %100 : vector<3x1x32xf32> to vector<3x8x32xf32>
    %102 = arith.mulf %97, %101 : vector<3x8x32xf32>
    %103 = vector.extract_strided_slice %102 {offsets = [2, 0, 0], sizes = [1, 8, 32], strides = [1, 1, 1]} : vector<3x8x32xf32> to vector<1x8x32xf32>
    %104 = vector.shape_cast %103 : vector<1x8x32xf32> to vector<8x32xf32>
    %105 = vector.extract_strided_slice %102 {offsets = [0, 0, 0], sizes = [1, 8, 32], strides = [1, 1, 1]} : vector<3x8x32xf32> to vector<1x8x32xf32>
    %106 = vector.shape_cast %105 : vector<1x8x32xf32> to vector<8x32xf32>
    %107 = vector.extract_strided_slice %102 {offsets = [1, 0, 0], sizes = [1, 8, 32], strides = [1, 1, 1]} : vector<3x8x32xf32> to vector<1x8x32xf32>
    %108 = vector.shape_cast %107 : vector<1x8x32xf32> to vector<8x32xf32>
    %109 = tpu.concatenate %106, %108 in 0 : vector<8x32xf32>, vector<8x32xf32> -> vector<16x32xf32>
    %cst_35 = arith.constant dense<0.000000e+00> : vector<16x4xf32>
    %110 = tpu.matmul %109, %37, %cst_35 {dimension_numbers = #tpu.dot_dimension_numbers<[1], [0], [0], [1], [0, 0, 1, 1], [], []>} : vector<16x32xf32>, vector<32x4xf32>, vector<16x4xf32> -> vector<16x4xf32>
    %111 = vector.broadcast %38 : vector<1x4xf32> to vector<16x4xf32>
    %112 = arith.addf %110, %111 : vector<16x4xf32>
    %113 = vector.extract_strided_slice %112 {offsets = [0, 0], sizes = [8, 4], strides = [1, 1]} : vector<16x4xf32> to vector<8x4xf32>
    %114 = vector.extract_strided_slice %112 {offsets = [8, 0], sizes = [8, 4], strides = [1, 1]} : vector<16x4xf32> to vector<8x4xf32>
    %cst_36 = arith.constant dense<0xFF800000> : vector<8xf32>
    %115 = vector.multi_reduction <maximumf>, %113, %cst_36 [1] : vector<8x4xf32> to vector<8xf32>
    %116 = vector.shape_cast %115 : vector<8xf32> to vector<8x1xf32>
    %117 = vector.broadcast %116 : vector<8x1xf32> to vector<8x4xf32>
    %118 = arith.subf %113, %117 : vector<8x4xf32>
    %119 = math.exp %118 : vector<8x4xf32>
    %cst_37 = arith.constant dense<0.000000e+00> : vector<8xf32>
    %120 = vector.multi_reduction <add>, %119, %cst_37 [1] : vector<8x4xf32> to vector<8xf32>
    %121 = vector.shape_cast %120 : vector<8xf32> to vector<8x1xf32>
    %122 = tpu.reciprocal %121 {approx = true} : vector<8x1xf32> -> vector<8x1xf32>
    %123 = vector.broadcast %122 : vector<8x1xf32> to vector<8x4xf32>
    %124 = arith.mulf %119, %123 : vector<8x4xf32>
    %125 = arith.negf %114 : vector<8x4xf32>
    %126 = math.exp %125 : vector<8x4xf32>
    %cst_38 = arith.constant 1.000000e+00 : f32
    %127 = vector.broadcast %cst_38 : f32 to vector<8x4xf32>
    %128 = arith.addf %127, %126 : vector<8x4xf32>
    %129 = arith.divf %127, %128 : vector<8x4xf32>
    %130 = tpu.concatenate %104, %29, %26 in 0 : vector<8x32xf32>, vector<32x32xf32>, vector<32x32xf32> -> vector<72x32xf32>
    %c0_39 = arith.constant 0 : index
    %c0_40 = arith.constant 0 : index
    %131 = vector.load %arg6[%c0_39, %c0_40] : memref<72x32xf32, #tpu.memory_space<vmem>>, vector<72x32xf32>
    tpu.vector_store %arg6[%c0_39, %c0_40], %130 {strides = array<i32>} : memref<72x32xf32, #tpu.memory_space<vmem>>, vector<72x32xf32>,
    %132 = tpu.concatenate %113, %124, %129 in 0 : vector<8x4xf32>, vector<8x4xf32>, vector<8x4xf32> -> vector<24x4xf32>
    %c0_41 = arith.constant 0 : index
    %c0_42 = arith.constant 0 : index
    %133 = vector.load %arg7[%c0_41, %c0_42] : memref<24x4xf32, #tpu.memory_space<vmem>>, vector<24x4xf32>
    tpu.vector_store %arg7[%c0_41, %c0_42], %132 {strides = array<i32>} : memref<24x4xf32, #tpu.memory_space<vmem>>, vector<24x4xf32>,
    return
  }
}

</mosaic_0001>

<llo_original>
// kernel: soft_forward.1
$region0: #{soft_forward.1}
  #allocation0 [shape = 'u32[]', space=smem, size = 0x4, offset = 0x4, fixed_abs, tag = 'smem constant byte address 0x4 - core index']
  #allocation1 [shape = 'u32[144,128]{1,0:T(1,128)}', space=vmem, size = 0x12000, scoped, tag = 'internal scratch']
  %s0 = inlined_call_operand.vmem [shape: f32[8,32], index: 0, kind: input, shape index: {}]
  %s1 = inlined_call_operand.vmem [shape: f32[32,32], index: 1, kind: input, shape index: {}]
  %s2 = inlined_call_operand.vmem [shape: f32[32,32], index: 2, kind: input, shape index: {}]
  %s3 = inlined_call_operand.vmem [shape: f32[64,32], index: 3, kind: input, shape index: {}]
  %s4 = inlined_call_operand.vmem [shape: f32[2,32], index: 4, kind: input, shape index: {}]
  %s5 = inlined_call_operand.vmem [shape: f32[33,4], index: 5, kind: input, shape index: {}]
  %s6 = inlined_call_operand.vmem [shape: f32[72,32], index: 6, kind: output, shape index: {0}]
  %s7 = inlined_call_operand.vmem [shape: f32[24,4], index: 7, kind: output, shape index: {1}]
  %8 = xla_tuple %s6, %s7
  %s9 = sld [smem:[#allocation0]]
  $region42: #{soft_forward.1} parent=0
    _
  %s11 = ssub.s32 1, %s9
  %s12 = scalar_select 0, %s11, %s9
  // Predicated region
  $region2: #{soft_forward.1} parent=0 // pred_check
    _
  $region3: #{soft_forward.1} parent=0 // pred_check_branch
    %14 = sbr.rel (0) target = $region5
  $region4: #{soft_forward.1} parent=0 // pred_region
    _
  $region5: #{soft_forward.1} parent=0 // pred_fallthru
    _
  // Predicated region
  $region6: #{soft_forward.1} parent=0 // pred_check
    _
  $region7: #{soft_forward.1} parent=0 // pred_check_branch
    %16 = sbr.rel (0) target = $region9
  $region8: #{soft_forward.1} parent=0 // pred_region
    _
  $region9: #{soft_forward.1} parent=0 // pred_fallthru
    _
  // Predicated region
  $region10: #{soft_forward.1} parent=0 // pred_check
    _
  $region11: #{soft_forward.1} parent=0 // pred_check_branch
    %18 = sbr.rel (0) target = $region13
  $region12: #{soft_forward.1} parent=0 // pred_region
    _
  $region13: #{soft_forward.1} parent=0 // pred_fallthru
    _
  // Predicated region
  $region14: #{soft_forward.1} parent=0 // pred_check
    _
  $region15: #{soft_forward.1} parent=0 // pred_check_branch
    %20 = sbr.rel (0) target = $region17
  $region16: #{soft_forward.1} parent=0 // pred_region
    _
  $region17: #{soft_forward.1} parent=0 // pred_fallthru
    _
  // Predicated region
  $region18: #{soft_forward.1} parent=0 // pred_check
    _
  $region19: #{soft_forward.1} parent=0 // pred_check_branch
    %22 = sbr.rel (0) target = $region21
  $region20: #{soft_forward.1} parent=0 // pred_region
    _
  $region21: #{soft_forward.1} parent=0 // pred_fallthru
    _
  // Predicated region
  $region22: #{soft_forward.1} parent=0 // pred_check
    _
  $region23: #{soft_forward.1} parent=0 // pred_check_branch
    %24 = sbr.rel (0) target = $region25
  $region24: #{soft_forward.1} parent=0 // pred_region
    _
  $region25: #{soft_forward.1} parent=0 // pred_fallthru
    _
  %v25 = vld [vmem:[%s0] sm:$0xff]
  %v26 = vld [vmem:[%s1] sm:$0xff]
  %v27 = vld [vmem:[%s1 + $0x8] sm:$0xff]
  %v28 = vld [vmem:[%s1 + $0x10] sm:$0xff]
  %v29 = vld [vmem:[%s1 + $0x18] sm:$0xff]
  %v30 = vld [vmem:[%s2] sm:$0xff]
  %v31 = vld [vmem:[%s2 + $0x8] sm:$0xff]
  %v32 = vld [vmem:[%s2 + $0x10] sm:$0xff]
  %v33 = vld [vmem:[%s2 + $0x18] sm:$0xff]
  %vm34 = vcmask 261120
  %v35 = vsel %vm34, %v30, inf
  %v36 = vsel %vm34, %v31, inf
  %v37 = vsel %vm34, %v32, inf
  %v38 = vsel %vm34, %v33, inf
  %v39 = vmin.f32 %v35, %v36
  %v40 = vmin.f32 %v37, %v38
  %v41 = vmin.f32 %v39, %v40
  %42 = vmin.xlane.f32.xlu0 %v41
  %v43 = vpop.xlane.xlu0 %42
  %v44 = vrot.slane %v43, 4
  %v45 = vmin.f32 %v43, %v44
  %v46 = vrot.slane %v45, 2
  %v47 = vmin.f32 %v45, %v46
  %v48 = vrot.slane %v47, 1
  %v49 = vmin.f32 %v47, %v48
  %s50 = vtos %v49
  %v51 = vsel %vm34, %v30, -inf
  %v52 = vsel %vm34, %v31, -inf
  %v53 = vsel %vm34, %v32, -inf
  %v54 = vsel %vm34, %v33, -inf
  %v55 = vmax.f32 %v51, %v52
  %v56 = vmax.f32 %v53, %v54
  %v57 = vmax.f32 %v55, %v56
  %58 = vmax.xlane.f32.xlu0 %v57
  %v59 = vpop.xlane.xlu0 %58
  %v60 = vrot.slane %v59, 4
  %v61 = vmax.f32 %v59, %v60
  %v62 = vrot.slane %v61, 2
  %v63 = vmax.f32 %v61, %v62
  %v64 = vrot.slane %v63, 1
  %v65 = vmax.f32 %v63, %v64
  %s66 = vtos %v65
  %s67 = ssub.f32 %s66, %s50
  %s68 = smax.f32 %s67, 1e-12
  %v69 = vstv %s68
  %v70 = vrcp.pop %v69
  %s71 = vtos %v70
  %v72 = vstv %s50
  %v73 = vsub.f32 %v30, %v72
  %v74 = vsub.f32 %v31, %v72
  %v75 = vsub.f32 %v32, %v72
  %v76 = vsub.f32 %v33, %v72
  %v77 = vstv %s71
  %v78 = vmul.f32 %v73, %v77
  %v79 = vmul.f32 %v74, %v77
  %v80 = vmul.f32 %v75, %v77
  %v81 = vmul.f32 %v76, %v77
  %v82 = vsub.f32 %v78, 0.5
  %v83 = vsub.f32 %v79, 0.5
  %v84 = vsub.f32 %v80, 0.5
  %v85 = vsub.f32 %v81, 0.5
  %v86 = vmul.f32 %v82, 8.0
  %v87 = vmul.f32 %v83, 8.0
  %v88 = vmul.f32 %v84, 8.0
  %v89 = vmul.f32 %v85, 8.0
  %v90 = vxor.u32 %v86, 2147483648
  %v91 = vxor.u32 %v87, 2147483648
  %v92 = vxor.u32 %v88, 2147483648
  %v93 = vxor.u32 %v89, 2147483648
  %v94 = vmul.f32 %v90, 1.442695
  %v95 = vpow.pop %v94
  %v96 = vmul.f32 %v91, 1.442695
  %v97 = vpow.pop %v96
  %v98 = vmul.f32 %v92, 1.442695
  %v99 = vpow.pop %v98
  %v100 = vmul.f32 %v93, 1.442695
  %v101 = vpow.pop %v100
  %v102 = vadd.f32 %v95, 1.0
  %v103 = vadd.f32 %v97, 1.0
  %v104 = vadd.f32 %v99, 1.0
  %v105 = vadd.f32 %v101, 1.0
  %v106 = vrcp.pop %v102
  %v107 = vmul.f32 1.0, %v106
  %v108 = vrcp.pop %v103
  %v109 = vmul.f32 1.0, %v108
  %v110 = vrcp.pop %v104
  %v111 = vmul.f32 1.0, %v110
  %v112 = vrcp.pop %v105
  %v113 = vmul.f32 1.0, %v112
  %v114 = vmul.f32 %v26, %v107
  %v115 = vmul.f32 %v27, %v109
  %v116 = vmul.f32 %v28, %v111
  %v117 = vmul.f32 %v29, %v113
  %v118 = vsub.f32 %v26, %v114
  %v119 = vsub.f32 %v27, %v115
  %v120 = vsub.f32 %v28, %v116
  %v121 = vsub.f32 %v29, %v117
  %v122 = vsub.f32 %v26, %v118
  %v123 = vsub.f32 %v27, %v119
  %v124 = vsub.f32 %v28, %v120
  %v125 = vsub.f32 %v29, %v121
  %v126 = vld [vmem:[%s3] sm:$0xff]
  %v127 = vld [vmem:[%s3 + $0x8] sm:$0xff]
  %v128 = vld [vmem:[%s3 + $0x10] sm:$0xff]
  %v129 = vld [vmem:[%s3 + $0x18] sm:$0xff]
  %v130 = vld [vmem:[%s3 + $0x20] sm:$0xff]
  %v131 = vld [vmem:[%s3 + $0x28] sm:$0xff]
  %v132 = vld [vmem:[%s3 + $0x30] sm:$0xff]
  %v133 = vld [vmem:[%s3 + $0x38] sm:$0xff]
  %v134 = vld [vmem:[%s4] sm:$0x3]
  %v135 = vld [vmem:[%s5] sm:$0xff]
  %v136 = vld [vmem:[%s5 + $0x8] sm:$0xff]
  %v137 = vld [vmem:[%s5 + $0x10] sm:$0xff]
  %v138 = vld [vmem:[%s5 + $0x18] sm:$0xff]
  %v139 = vld [vmem:[%s5 + $0x20] sm:$0x1]
  %144 = vrot.lane.b32.xlu0 %v118, 32
  %v145 = vpop.permute.xlu0 %144
  %146 = vrot.lane.b32.xlu0 %v119, 32
  %v147 = vpop.permute.xlu0 %146
  %148 = vrot.lane.b32.xlu0 %v120, 32
  %v149 = vpop.permute.xlu0 %148
  %150 = vrot.lane.b32.xlu0 %v121, 32
  %v151 = vpop.permute.xlu0 %150
  %160 = vrot.lane.b32.xlu0 %v122, 64
  %v161 = vpop.permute.xlu0 %160
  %162 = vrot.lane.b32.xlu0 %v123, 64
  %v163 = vpop.permute.xlu0 %162
  %164 = vrot.lane.b32.xlu0 %v124, 64
  %v165 = vpop.permute.xlu0 %164
  %166 = vrot.lane.b32.xlu0 %v125, 64
  %v167 = vpop.permute.xlu0 %166
  %v172 = vsel %vm34, %v26, %v145
  %v173 = vsel %vm34, %v27, %v147
  %v174 = vsel %vm34, %v28, %v149
  %v175 = vsel %vm34, %v29, %v151
  %vm176 = vcmask 523264
  %v177 = vsel %vm176, %v172, %v161
  %v178 = vsel %vm176, %v173, %v163
  %v179 = vsel %vm176, %v174, %v165
  %v180 = vsel %vm176, %v175, %v167
  %v182 = vsel %vm34, %v25, 0
  %184 = vmatprep.subr.mxu0 0.0
  %185 = vmatpush1.msra.mxu0 %v177
  %186 = vmatprep.subr.mxu0 0.0
  %187 = vmatpush1.msra.mxu0 %v178
  %188 = vmatprep.subr.mxu0 0.0
  %189 = vmatpush1.msra.mxu0 %v179
  %190 = vmatprep.subr.mxu0 0.0
  %191 = vmatpush1.msra.mxu0 %v180
  %192 = vmatprep.subr.mxu0 0.0
  %193 = vmatpush1.msra.mxu0 0.0
  %194 = vmatprep.subr.mxu0 0.0
  %195 = vmatpush1.msra.mxu0 0.0
  %196 = vmatprep.subr.mxu0 0.0
  %197 = vmatpush1.msra.mxu0 0.0
  %198 = vmatprep.subr.mxu0 0.0
  %199 = vmatpush1.msra.mxu0 0.0
  %200 = vmatprep.subr.mxu0 0.0
  %201 = vmatpush1.msra.mxu0 0.0
  %202 = vmatprep.subr.mxu0 0.0
  %203 = vmatpush1.msra.mxu0 0.0
  %204 = vmatprep.subr.mxu0 0.0
  %205 = vmatpush1.msra.mxu0 0.0
  %206 = vmatprep.subr.mxu0 0.0
  %207 = vmatpush1.msra.mxu0 0.0
  %208 = vmatprep.subr.mxu0 0.0
  %209 = vmatpush1.msra.mxu0 0.0
  %210 = vmatprep.subr.mxu0 0.0
  %211 = vmatpush1.msra.mxu0 0.0
  %212 = vmatprep.subr.mxu0 0.0
  %213 = vmatpush1.msra.mxu0 0.0
  %214 = vmatprep.subr.mxu0 0.0
  %215 = vmatpush1.msra.mxu0 0.0
  %216 = vmatprep.subr.mxu0 0.0
  %217 = vmatpush1.msra.mxu0 0.0
  %218 = vmatprep.subr.mxu0 0.0
  %219 = vmatpush1.msra.mxu0 0.0
  %220 = vmatprep.subr.mxu0 0.0
  %221 = vmatpush1.msra.mxu0 0.0
  %222 = vmatprep.subr.mxu0 0.0
  %223 = vmatpush1.msra.mxu0 0.0
  %224 = vmatprep.subr.mxu0 0.0
  %225 = vmatpush1.msra.mxu0 0.0
  %226 = vmatprep.subr.mxu0 0.0
  %227 = vmatpush1.msra.mxu0 0.0
  %228 = vmatprep.subr.mxu0 0.0
  %229 = vmatpush1.msra.mxu0 0.0
  %230 = vmatprep.subr.mxu0 0.0
  %231 = vmatpush1.msra.mxu0 0.0
  %232 = vmatprep.subr.mxu0 0.0
  %233 = vmatpush1.msra.mxu0 0.0
  %234 = vmatprep.subr.mxu0 0.0
  %235 = vmatpush1.msra.mxu0 0.0
  %236 = vmatprep.subr.mxu0 0.0
  %237 = vmatpush1.msra.mxu0 0.0
  %238 = vmatprep.subr.mxu0 0.0
  %239 = vmatpush1.msra.mxu0 0.0
  %240 = vmatprep.subr.mxu0 0.0
  %241 = vmatpush1.msra.mxu0 0.0
  %242 = vmatprep.subr.mxu0 0.0
  %243 = vmatpush1.msra.mxu0 0.0
  %244 = vmatprep.subr.mxu0 0.0
  %245 = vmatpush1.msra.mxu0 0.0
  %246 = vmatprep.subr.mxu0 0.0
  %247 = vmatpush1.msra.mxu0 0.0
  %248 = vmatprep.mubr.f32.mxu0 0.0
  %249 = vmatmul.mubr.f32.gmra.mrb[0].mxu0 %v182
  %v250 = vpop.f32.mrb[0].mxu0
  %v251 = vadd.f32 0.0, %v250
  %v252 = vpop.f32.mrb[0].mxu0
  %253 = vdwg.mxu0
  %255 = vrot.lane.b32.xlu0 %v251, 96
  %v256 = vpop.permute.xlu0 %255
  %257 = vrot.lane.b32.xlu0 %v251, 64
  %v258 = vpop.permute.xlu0 %257
  %v259 = vlaneseq
  %v260 = vshrl.u32 %v259, 7
  %v261 = vsub.s32 0, %v260
  %v262 = vrot.slane %v134, %v261
  %v263 = vsel %vm34, %v251, 0
  %v265 = vsel %vm34, %v256, 0
  %v267 = vsel %vm34, %v258, 0
  %269 = vmatprep.subr.mxu0 0.0
  %270 = vmatpush1.msra.mxu0 %v126
  %271 = vmatprep.subr.mxu0 0.0
  %272 = vmatpush1.msra.mxu0 %v127
  %273 = vmatprep.subr.mxu0 0.0
  %274 = vmatpush1.msra.mxu0 %v128
  %275 = vmatprep.subr.mxu0 0.0
  %276 = vmatpush1.msra.mxu0 %v129
  %277 = vmatprep.subr.mxu0 0.0
  %278 = vmatpush1.msra.mxu0 0.0
  %279 = vmatprep.subr.mxu0 0.0
  %280 = vmatpush1.msra.mxu0 0.0
  %281 = vmatprep.subr.mxu0 0.0
  %282 = vmatpush1.msra.mxu0 0.0
  %283 = vmatprep.subr.mxu0 0.0
  %284 = vmatpush1.msra.mxu0 0.0
  %285 = vmatprep.subr.mxu0 0.0
  %286 = vmatpush1.msra.mxu0 0.0
  %287 = vmatprep.subr.mxu0 0.0
  %288 = vmatpush1.msra.mxu0 0.0
  %289 = vmatprep.subr.mxu0 0.0
  %290 = vmatpush1.msra.mxu0 0.0
  %291 = vmatprep.subr.mxu0 0.0
  %292 = vmatpush1.msra.mxu0 0.0
  %293 = vmatprep.subr.mxu0 0.0
  %294 = vmatpush1.msra.mxu0 0.0
  %295 = vmatprep.subr.mxu0 0.0
  %296 = vmatpush1.msra.mxu0 0.0
  %297 = vmatprep.subr.mxu0 0.0
  %298 = vmatpush1.msra.mxu0 0.0
  %299 = vmatprep.subr.mxu0 0.0
  %300 = vmatpush1.msra.mxu0 0.0
  %301 = vmatprep.subr.mxu0 0.0
  %302 = vmatpush1.msra.mxu0 0.0
  %303 = vmatprep.subr.mxu0 0.0
  %304 = vmatpush1.msra.mxu0 0.0
  %305 = vmatprep.subr.mxu0 0.0
  %306 = vmatpush1.msra.mxu0 0.0
  %307 = vmatprep.subr.mxu0 0.0
  %308 = vmatpush1.msra.mxu0 0.0
  %309 = vmatprep.subr.mxu0 0.0
  %310 = vmatpush1.msra.mxu0 0.0
  %311 = vmatprep.subr.mxu0 0.0
  %312 = vmatpush1.msra.mxu0 0.0
  %313 = vmatprep.subr.mxu0 0.0
  %314 = vmatpush1.msra.mxu0 0.0
  %315 = vmatprep.subr.mxu0 0.0
  %316 = vmatpush1.msra.mxu0 0.0
  %317 = vmatprep.subr.mxu0 0.0
  %318 = vmatpush1.msra.mxu0 0.0
  %319 = vmatprep.subr.mxu0 0.0
  %320 = vmatpush1.msra.mxu0 0.0
  %321 = vmatprep.subr.mxu0 0.0
  %322 = vmatpush1.msra.mxu0 0.0
  %323 = vmatprep.subr.mxu0 0.0
  %324 = vmatpush1.msra.mxu0 0.0
  %325 = vmatprep.subr.mxu0 0.0
  %326 = vmatpush1.msra.mxu0 0.0
  %327 = vmatprep.subr.mxu0 0.0
  %328 = vmatpush1.msra.mxu0 0.0
  %329 = vmatprep.subr.mxu0 0.0
  %330 = vmatpush1.msra.mxu0 0.0
  %331 = vmatprep.subr.mxu0 0.0
  %332 = vmatpush1.msra.mxu0 0.0
  %333 = vmatprep.mubr.f32.mxu0 0.0
  %334 = vmatmul.mubr.f32.gmra.mrb[0].mxu0 %v263
  %v335 = vpop.f32.mrb[0].mxu0
  %v336 = vadd.f32 %v262, %v335
  %v337 = vpop.f32.mrb[0].mxu0
  %338 = vmatprep.mubr.f32.mxu0 0.0
  %339 = vmatmul.mubr.f32.gmra.mrb[0].mxu0 %v265
  %v340 = vpop.f32.mrb[0].mxu0
  %v341 = vadd.f32 %v262, %v340
  %v342 = vpop.f32.mrb[0].mxu0
  %343 = vmatprep.mubr.f32.mxu0 0.0
  %344 = vmatmul.mubr.f32.gmra.mrb[0].mxu0 %v267
  %v345 = vpop.f32.mrb[0].mxu0
  %v346 = vadd.f32 %v262, %v345
  %v347 = vpop.f32.mrb[0].mxu0
  %348 = vdwg.mxu0
  %v349 = vmax.f32 %v336, 0.0
  %v350 = vmax.f32 %v341, 0.0
  %v351 = vmax.f32 %v346, 0.0
  %v352 = vsel %vm34, %v349, 0.0
  %v353 = vrot.slane %v352, 4
  %v354 = vadd.f32 %v352, %v353
  %v355 = vrot.slane %v354, 2
  %v356 = vadd.f32 %v354, %v355
  %v357 = vrot.slane %v356, 1
  %v358 = vadd.f32 %v356, %v357
  %v359 = vsel %vm34, %v350, 0.0
  %v360 = vrot.slane %v359, 4
  %v361 = vadd.f32 %v359, %v360
  %v362 = vrot.slane %v361, 2
  %v363 = vadd.f32 %v361, %v362
  %v364 = vrot.slane %v363, 1
  %v365 = vadd.f32 %v363, %v364
  %v366 = vsel %vm34, %v351, 0.0
  %v367 = vrot.slane %v366, 4
  %v368 = vadd.f32 %v366, %v367
  %v369 = vrot.slane %v368, 2
  %v370 = vadd.f32 %v368, %v369
  %v371 = vrot.slane %v370, 1
  %v372 = vadd.f32 %v370, %v371
  %v373 = vrcp.pop 8.0
  %v374 = vmul.f32 %v358, %v373
  %v375 = vmul.f32 %v365, %v373
  %v376 = vmul.f32 %v372, %v373
  %v377 = vsub.f32 %v349, %v374
  %v378 = vsub.f32 %v350, %v375
  %v379 = vsub.f32 %v351, %v376
  %v380 = vmul.f32 %v377, %v377
  %v381 = vmul.f32 %v378, %v378
  %v382 = vmul.f32 %v379, %v379
  %v383 = vsel %vm34, %v380, 0.0
  %v384 = vrot.slane %v383, 4
  %v385 = vadd.f32 %v383, %v384
  %v386 = vrot.slane %v385, 2
  %v387 = vadd.f32 %v385, %v386
  %v388 = vrot.slane %v387, 1
  %v389 = vadd.f32 %v387, %v388
  %v390 = vsel %vm34, %v381, 0.0
  %v391 = vrot.slane %v390, 4
  %v392 = vadd.f32 %v390, %v391
  %v393 = vrot.slane %v392, 2
  %v394 = vadd.f32 %v392, %v393
  %v395 = vrot.slane %v394, 1
  %v396 = vadd.f32 %v394, %v395
  %v397 = vsel %vm34, %v382, 0.0
  %v398 = vrot.slane %v397, 4
  %v399 = vadd.f32 %v397, %v398
  %v400 = vrot.slane %v399, 2
  %v401 = vadd.f32 %v399, %v400
  %v402 = vrot.slane %v401, 1
  %v403 = vadd.f32 %v401, %v402
  %v404 = vmul.f32 %v389, %v373
  %v405 = vmul.f32 %v396, %v373
  %v406 = vmul.f32 %v403, %v373
  %v407 = vadd.f32 %v404, 1e-05
  %v408 = vadd.f32 %v405, 1e-05
  %v409 = vadd.f32 %v406, 1e-05
  %v410 = vrsqrt.pop %v407
  %v411 = vrsqrt.pop %v408
  %v412 = vrsqrt.pop %v409
  %v413 = vmul.f32 %v377, %v410
  %v414 = vmul.f32 %v378, %v411
  %v415 = vmul.f32 %v379, %v412
  %v417 = vsel %vm34, %v413, 0
  %419 = vmatprep.subr.mxu0 0.0
  %420 = vmatpush1.msra.mxu0 %v26
  %421 = vmatprep.subr.mxu0 0.0
  %422 = vmatpush1.msra.mxu0 %v27
  %423 = vmatprep.subr.mxu0 0.0
  %424 = vmatpush1.msra.mxu0 %v28
  %425 = vmatprep.subr.mxu0 0.0
  %426 = vmatpush1.msra.mxu0 %v29
  %427 = vmatprep.subr.mxu0 0.0
  %428 = vmatpush1.msra.mxu0 0.0
  %429 = vmatprep.subr.mxu0 0.0
  %430 = vmatpush1.msra.mxu0 0.0
  %431 = vmatprep.subr.mxu0 0.0
  %432 = vmatpush1.msra.mxu0 0.0
  %433 = vmatprep.subr.mxu0 0.0
  %434 = vmatpush1.msra.mxu0 0.0
  %435 = vmatprep.subr.mxu0 0.0
  %436 = vmatpush1.msra.mxu0 0.0
  %437 = vmatprep.subr.mxu0 0.0
  %438 = vmatpush1.msra.mxu0 0.0
  %439 = vmatprep.subr.mxu0 0.0
  %440 = vmatpush1.msra.mxu0 0.0
  %441 = vmatprep.subr.mxu0 0.0
  %442 = vmatpush1.msra.mxu0 0.0
  %443 = vmatprep.subr.mxu0 0.0
  %444 = vmatpush1.msra.mxu0 0.0
  %445 = vmatprep.subr.mxu0 0.0
  %446 = vmatpush1.msra.mxu0 0.0
  %447 = vmatprep.subr.mxu0 0.0
  %448 = vmatpush1.msra.mxu0 0.0
  %449 = vmatprep.subr.mxu0 0.0
  %450 = vmatpush1.msra.mxu0 0.0
  %451 = vmatprep.subr.mxu0 0.0
  %452 = vmatpush1.msra.mxu0 0.0
  %453 = vmatprep.subr.mxu0 0.0
  %454 = vmatpush1.msra.mxu0 0.0
  %455 = vmatprep.subr.mxu0 0.0
  %456 = vmatpush1.msra.mxu0 0.0
  %457 = vmatprep.subr.mxu0 0.0
  %458 = vmatpush1.msra.mxu0 0.0
  %459 = vmatprep.subr.mxu0 0.0
  %460 = vmatpush1.msra.mxu0 0.0
  %461 = vmatprep.subr.mxu0 0.0
  %462 = vmatpush1.msra.mxu0 0.0
  %463 = vmatprep.subr.mxu0 0.0
  %464 = vmatpush1.msra.mxu0 0.0
  %465 = vmatprep.subr.mxu0 0.0
  %466 = vmatpush1.msra.mxu0 0.0
  %467 = vmatprep.subr.mxu0 0.0
  %468 = vmatpush1.msra.mxu0 0.0
  %469 = vmatprep.subr.mxu0 0.0
  %470 = vmatpush1.msra.mxu0 0.0
  %471 = vmatprep.subr.mxu0 0.0
  %472 = vmatpush1.msra.mxu0 0.0
  %473 = vmatprep.subr.mxu0 0.0
  %474 = vmatpush1.msra.mxu0 0.0
  %475 = vmatprep.subr.mxu0 0.0
  %476 = vmatpush1.msra.mxu0 0.0
  %477 = vmatprep.subr.mxu0 0.0
  %478 = vmatpush1.msra.mxu0 0.0
  %479 = vmatprep.subr.mxu0 0.0
  %480 = vmatpush1.msra.mxu0 0.0
  %481 = vmatprep.subr.mxu0 0.0
  %482 = vmatpush1.msra.mxu0 0.0
  %483 = vmatprep.mubr.f32.mxu0 0.0
  %484 = vmatmul.mubr.f32.gmra.mrb[0].mxu0 %v417
  %v485 = vpop.f32.mrb[0].mxu0
  %v486 = vadd.f32 0.0, %v485
  %v487 = vpop.f32.mrb[0].mxu0
  %488 = vdwg.mxu0
  %v490 = vsel %vm34, %v414, 0
  %492 = vmatprep.subr.mxu0 0.0
  %493 = vmatpush1.msra.mxu0 %v118
  %494 = vmatprep.subr.mxu0 0.0
  %495 = vmatpush1.msra.mxu0 %v119
  %496 = vmatprep.subr.mxu0 0.0
  %497 = vmatpush1.msra.mxu0 %v120
  %498 = vmatprep.subr.mxu0 0.0
  %499 = vmatpush1.msra.mxu0 %v121
  %500 = vmatprep.subr.mxu0 0.0
  %501 = vmatpush1.msra.mxu0 0.0
  %502 = vmatprep.subr.mxu0 0.0
  %503 = vmatpush1.msra.mxu0 0.0
  %504 = vmatprep.subr.mxu0 0.0
  %505 = vmatpush1.msra.mxu0 0.0
  %506 = vmatprep.subr.mxu0 0.0
  %507 = vmatpush1.msra.mxu0 0.0
  %508 = vmatprep.subr.mxu0 0.0
  %509 = vmatpush1.msra.mxu0 0.0
  %510 = vmatprep.subr.mxu0 0.0
  %511 = vmatpush1.msra.mxu0 0.0
  %512 = vmatprep.subr.mxu0 0.0
  %513 = vmatpush1.msra.mxu0 0.0
  %514 = vmatprep.subr.mxu0 0.0
  %515 = vmatpush1.msra.mxu0 0.0
  %516 = vmatprep.subr.mxu0 0.0
  %517 = vmatpush1.msra.mxu0 0.0
  %518 = vmatprep.subr.mxu0 0.0
  %519 = vmatpush1.msra.mxu0 0.0
  %520 = vmatprep.subr.mxu0 0.0
  %521 = vmatpush1.msra.mxu0 0.0
  %522 = vmatprep.subr.mxu0 0.0
  %523 = vmatpush1.msra.mxu0 0.0
  %524 = vmatprep.subr.mxu0 0.0
  %525 = vmatpush1.msra.mxu0 0.0
  %526 = vmatprep.subr.mxu0 0.0
  %527 = vmatpush1.msra.mxu0 0.0
  %528 = vmatprep.subr.mxu0 0.0
  %529 = vmatpush1.msra.mxu0 0.0
  %530 = vmatprep.subr.mxu0 0.0
  %531 = vmatpush1.msra.mxu0 0.0
  %532 = vmatprep.subr.mxu0 0.0
  %533 = vmatpush1.msra.mxu0 0.0
  %534 = vmatprep.subr.mxu0 0.0
  %535 = vmatpush1.msra.mxu0 0.0
  %536 = vmatprep.subr.mxu0 0.0
  %537 = vmatpush1.msra.mxu0 0.0
  %538 = vmatprep.subr.mxu0 0.0
  %539 = vmatpush1.msra.mxu0 0.0
  %540 = vmatprep.subr.mxu0 0.0
  %541 = vmatpush1.msra.mxu0 0.0
  %542 = vmatprep.subr.mxu0 0.0
  %543 = vmatpush1.msra.mxu0 0.0
  %544 = vmatprep.subr.mxu0 0.0
  %545 = vmatpush1.msra.mxu0 0.0
  %546 = vmatprep.subr.mxu0 0.0
  %547 = vmatpush1.msra.mxu0 0.0
  %548 = vmatprep.subr.mxu0 0.0
  %549 = vmatpush1.msra.mxu0 0.0
  %550 = vmatprep.subr.mxu0 0.0
  %551 = vmatpush1.msra.mxu0 0.0
  %552 = vmatprep.subr.mxu0 0.0
  %553 = vmatpush1.msra.mxu0 0.0
  %554 = vmatprep.subr.mxu0 0.0
  %555 = vmatpush1.msra.mxu0 0.0
  %556 = vmatprep.mubr.f32.mxu0 0.0
  %557 = vmatmul.mubr.f32.gmra.mrb[0].mxu0 %v490
  %v558 = vpop.f32.mrb[0].mxu0
  %v559 = vadd.f32 0.0, %v558
  %v560 = vpop.f32.mrb[0].mxu0
  %561 = vdwg.mxu0
  %v563 = vsel %vm34, %v415, 0
  %565 = vmatprep.subr.mxu0 0.0
  %566 = vmatpush1.msra.mxu0 %v122
  %567 = vmatprep.subr.mxu0 0.0
  %568 = vmatpush1.msra.mxu0 %v123
  %569 = vmatprep.subr.mxu0 0.0
  %570 = vmatpush1.msra.mxu0 %v124
  %571 = vmatprep.subr.mxu0 0.0
  %572 = vmatpush1.msra.mxu0 %v125
  %573 = vmatprep.subr.mxu0 0.0
  %574 = vmatpush1.msra.mxu0 0.0
  %575 = vmatprep.subr.mxu0 0.0
  %576 = vmatpush1.msra.mxu0 0.0
  %577 = vmatprep.subr.mxu0 0.0
  %578 = vmatpush1.msra.mxu0 0.0
  %579 = vmatprep.subr.mxu0 0.0
  %580 = vmatpush1.msra.mxu0 0.0
  %581 = vmatprep.subr.mxu0 0.0
  %582 = vmatpush1.msra.mxu0 0.0
  %583 = vmatprep.subr.mxu0 0.0
  %584 = vmatpush1.msra.mxu0 0.0
  %585 = vmatprep.subr.mxu0 0.0
  %586 = vmatpush1.msra.mxu0 0.0
  %587 = vmatprep.subr.mxu0 0.0
  %588 = vmatpush1.msra.mxu0 0.0
  %589 = vmatprep.subr.mxu0 0.0
  %590 = vmatpush1.msra.mxu0 0.0
  %591 = vmatprep.subr.mxu0 0.0
  %592 = vmatpush1.msra.mxu0 0.0
  %593 = vmatprep.subr.mxu0 0.0
  %594 = vmatpush1.msra.mxu0 0.0
  %595 = vmatprep.subr.mxu0 0.0
  %596 = vmatpush1.msra.mxu0 0.0
  %597 = vmatprep.subr.mxu0 0.0
  %598 = vmatpush1.msra.mxu0 0.0
  %599 = vmatprep.subr.mxu0 0.0
  %600 = vmatpush1.msra.mxu0 0.0
  %601 = vmatprep.subr.mxu0 0.0
  %602 = vmatpush1.msra.mxu0 0.0
  %603 = vmatprep.subr.mxu0 0.0
  %604 = vmatpush1.msra.mxu0 0.0
  %605 = vmatprep.subr.mxu0 0.0
  %606 = vmatpush1.msra.mxu0 0.0
  %607 = vmatprep.subr.mxu0 0.0
  %608 = vmatpush1.msra.mxu0 0.0
  %609 = vmatprep.subr.mxu0 0.0
  %610 = vmatpush1.msra.mxu0 0.0
  %611 = vmatprep.subr.mxu0 0.0
  %612 = vmatpush1.msra.mxu0 0.0
  %613 = vmatprep.subr.mxu0 0.0
  %614 = vmatpush1.msra.mxu0 0.0
  %615 = vmatprep.subr.mxu0 0.0
  %616 = vmatpush1.msra.mxu0 0.0
  %617 = vmatprep.subr.mxu0 0.0
  %618 = vmatpush1.msra.mxu0 0.0
  %619 = vmatprep.subr.mxu0 0.0
  %620 = vmatpush1.msra.mxu0 0.0
  %621 = vmatprep.subr.mxu0 0.0
  %622 = vmatpush1.msra.mxu0 0.0
  %623 = vmatprep.subr.mxu0 0.0
  %624 = vmatpush1.msra.mxu0 0.0
  %625 = vmatprep.subr.mxu0 0.0
  %626 = vmatpush1.msra.mxu0 0.0
  %627 = vmatprep.subr.mxu0 0.0
  %628 = vmatpush1.msra.mxu0 0.0
  %629 = vmatprep.mubr.f32.mxu0 0.0
  %630 = vmatmul.mubr.f32.gmra.mrb[0].mxu0 %v563
  %v631 = vpop.f32.mrb[0].mxu0
  %v632 = vadd.f32 0.0, %v631
  %v633 = vpop.f32.mrb[0].mxu0
  %634 = vdwg.mxu0
  %v635 = vlaneseq
  %v636 = vshrl.u32 %v635, 7
  %v637 = vsub.s32 1, %v636
  %v638 = vrot.slane %v134, %v637
  %v640 = vsel %vm34, %v486, 0
  %v643 = vsel %vm34, %v559, 0
  %v646 = vsel %vm34, %v632, 0
  %648 = vmatprep.subr.mxu0 0.0
  %649 = vmatpush1.msra.mxu0 %v130
  %650 = vmatprep.subr.mxu0 0.0
  %651 = vmatpush1.msra.mxu0 %v131
  %652 = vmatprep.subr.mxu0 0.0
  %653 = vmatpush1.msra.mxu0 %v132
  %654 = vmatprep.subr.mxu0 0.0
  %655 = vmatpush1.msra.mxu0 %v133
  %656 = vmatprep.subr.mxu0 0.0
  %657 = vmatpush1.msra.mxu0 0.0
  %658 = vmatprep.subr.mxu0 0.0
  %659 = vmatpush1.msra.mxu0 0.0
  %660 = vmatprep.subr.mxu0 0.0
  %661 = vmatpush1.msra.mxu0 0.0
  %662 = vmatprep.subr.mxu0 0.0
  %663 = vmatpush1.msra.mxu0 0.0
  %664 = vmatprep.subr.mxu0 0.0
  %665 = vmatpush1.msra.mxu0 0.0
  %666 = vmatprep.subr.mxu0 0.0
  %667 = vmatpush1.msra.mxu0 0.0
  %668 = vmatprep.subr.mxu0 0.0
  %669 = vmatpush1.msra.mxu0 0.0
  %670 = vmatprep.subr.mxu0 0.0
  %671 = vmatpush1.msra.mxu0 0.0
  %672 = vmatprep.subr.mxu0 0.0
  %673 = vmatpush1.msra.mxu0 0.0
  %674 = vmatprep.subr.mxu0 0.0
  %675 = vmatpush1.msra.mxu0 0.0
  %676 = vmatprep.subr.mxu0 0.0
  %677 = vmatpush1.msra.mxu0 0.0
  %678 = vmatprep.subr.mxu0 0.0
  %679 = vmatpush1.msra.mxu0 0.0
  %680 = vmatprep.subr.mxu0 0.0
  %681 = vmatpush1.msra.mxu0 0.0
  %682 = vmatprep.subr.mxu0 0.0
  %683 = vmatpush1.msra.mxu0 0.0
  %684 = vmatprep.subr.mxu0 0.0
  %685 = vmatpush1.msra.mxu0 0.0
  %686 = vmatprep.subr.mxu0 0.0
  %687 = vmatpush1.msra.mxu0 0.0
  %688 = vmatprep.subr.mxu0 0.0
  %689 = vmatpush1.msra.mxu0 0.0
  %690 = vmatprep.subr.mxu0 0.0
  %691 = vmatpush1.msra.mxu0 0.0
  %692 = vmatprep.subr.mxu0 0.0
  %693 = vmatpush1.msra.mxu0 0.0
  %694 = vmatprep.subr.mxu0 0.0
  %695 = vmatpush1.msra.mxu0 0.0
  %696 = vmatprep.subr.mxu0 0.0
  %697 = vmatpush1.msra.mxu0 0.0
  %698 = vmatprep.subr.mxu0 0.0
  %699 = vmatpush1.msra.mxu0 0.0
  %700 = vmatprep.subr.mxu0 0.0
  %701 = vmatpush1.msra.mxu0 0.0
  %702 = vmatprep.subr.mxu0 0.0
  %703 = vmatpush1.msra.mxu0 0.0
  %704 = vmatprep.subr.mxu0 0.0
  %705 = vmatpush1.msra.mxu0 0.0
  %706 = vmatprep.subr.mxu0 0.0
  %707 = vmatpush1.msra.mxu0 0.0
  %708 = vmatprep.subr.mxu0 0.0
  %709 = vmatpush1.msra.mxu0 0.0
  %710 = vmatprep.subr.mxu0 0.0
  %711 = vmatpush1.msra.mxu0 0.0
  %712 = vmatprep.mubr.f32.mxu0 0.0
  %713 = vmatmul.mubr.f32.gmra.mrb[0].mxu0 %v640
  %v714 = vpop.f32.mrb[0].mxu0
  %v715 = vadd.f32 %v638, %v714
  %v716 = vpop.f32.mrb[0].mxu0
  %717 = vmatprep.mubr.f32.mxu0 0.0
  %718 = vmatmul.mubr.f32.gmra.mrb[0].mxu0 %v643
  %v719 = vpop.f32.mrb[0].mxu0
  %v720 = vadd.f32 %v638, %v719
  %v721 = vpop.f32.mrb[0].mxu0
  %722 = vmatprep.mubr.f32.mxu0 0.0
  %723 = vmatmul.mubr.f32.gmra.mrb[0].mxu0 %v646
  %v724 = vpop.f32.mrb[0].mxu0
  %v725 = vadd.f32 %v638, %v724
  %v726 = vpop.f32.mrb[0].mxu0
  %727 = vdwg.mxu0
  %v728 = vmax.f32 %v715, 0.0
  %v729 = vmax.f32 %v720, 0.0
  %v730 = vmax.f32 %v725, 0.0
  %v731 = vsel %vm34, %v728, 0.0
  %v732 = vrot.slane %v731, 4
  %v733 = vadd.f32 %v731, %v732
  %v734 = vrot.slane %v733, 2
  %v735 = vadd.f32 %v733, %v734
  %v736 = vrot.slane %v735, 1
  %v737 = vadd.f32 %v735, %v736
  %v738 = vsel %vm34, %v729, 0.0
  %v739 = vrot.slane %v738, 4
  %v740 = vadd.f32 %v738, %v739
  %v741 = vrot.slane %v740, 2
  %v742 = vadd.f32 %v740, %v741
  %v743 = vrot.slane %v742, 1
  %v744 = vadd.f32 %v742, %v743
  %v745 = vsel %vm34, %v730, 0.0
  %v746 = vrot.slane %v745, 4
  %v747 = vadd.f32 %v745, %v746
  %v748 = vrot.slane %v747, 2
  %v749 = vadd.f32 %v747, %v748
  %v750 = vrot.slane %v749, 1
  %v751 = vadd.f32 %v749, %v750
  %v752 = vmul.f32 %v737, %v373
  %v753 = vmul.f32 %v744, %v373
  %v754 = vmul.f32 %v751, %v373
  %v755 = vsub.f32 %v728, %v752
  %v756 = vsub.f32 %v729, %v753
  %v757 = vsub.f32 %v730, %v754
  %v758 = vmul.f32 %v755, %v755
  %v759 = vmul.f32 %v756, %v756
  %v760 = vmul.f32 %v757, %v757
  %v761 = vsel %vm34, %v758, 0.0
  %v762 = vrot.slane %v761, 4
  %v763 = vadd.f32 %v761, %v762
  %v764 = vrot.slane %v763, 2
  %v765 = vadd.f32 %v763, %v764
  %v766 = vrot.slane %v765, 1
  %v767 = vadd.f32 %v765, %v766
  %v768 = vsel %vm34, %v759, 0.0
  %v769 = vrot.slane %v768, 4
  %v770 = vadd.f32 %v768, %v769
  %v771 = vrot.slane %v770, 2
  %v772 = vadd.f32 %v770, %v771
  %v773 = vrot.slane %v772, 1
  %v774 = vadd.f32 %v772, %v773
  %v775 = vsel %vm34, %v760, 0.0
  %v776 = vrot.slane %v775, 4
  %v777 = vadd.f32 %v775, %v776
  %v778 = vrot.slane %v777, 2
  %v779 = vadd.f32 %v777, %v778
  %v780 = vrot.slane %v779, 1
  %v781 = vadd.f32 %v779, %v780
  %v782 = vmul.f32 %v767, %v373
  %v783 = vmul.f32 %v774, %v373
  %v784 = vmul.f32 %v781, %v373
  %v785 = vadd.f32 %v782, 1e-05
  %v786 = vadd.f32 %v783, 1e-05
  %v787 = vadd.f32 %v784, 1e-05
  %v788 = vrsqrt.pop %v785
  %v789 = vrsqrt.pop %v786
  %v790 = vrsqrt.pop %v787
  %v791 = vmul.f32 %v755, %v788
  %v792 = vmul.f32 %v756, %v789
  %v793 = vmul.f32 %v757, %v790
  %v794 = vlaneseq
  %v795 = vshrl.u32 %v794, 7
  %v796 = vsub.s32 0, %v795
  %v797 = vrot.slane %v139, %v796
  %v799 = vsel %vm34, %v791, 0
  %v802 = vsel %vm34, %v792, 0
  %804 = vmatprep.subr.mxu0 0.0
  %805 = vmatpush1.msra.mxu0 %v135
  %806 = vmatprep.subr.mxu0 0.0
  %807 = vmatpush1.msra.mxu0 %v136
  %808 = vmatprep.subr.mxu0 0.0
  %809 = vmatpush1.msra.mxu0 %v137
  %810 = vmatprep.subr.mxu0 0.0
  %811 = vmatpush1.msra.mxu0 %v138
  %812 = vmatprep.subr.mxu0 0.0
  %813 = vmatpush1.msra.mxu0 0.0
  %814 = vmatprep.subr.mxu0 0.0
  %815 = vmatpush1.msra.mxu0 0.0
  %816 = vmatprep.subr.mxu0 0.0
  %817 = vmatpush1.msra.mxu0 0.0
  %818 = vmatprep.subr.mxu0 0.0
  %819 = vmatpush1.msra.mxu0 0.0
  %820 = vmatprep.subr.mxu0 0.0
  %821 = vmatpush1.msra.mxu0 0.0
  %822 = vmatprep.subr.mxu0 0.0
  %823 = vmatpush1.msra.mxu0 0.0
  %824 = vmatprep.subr.mxu0 0.0
  %825 = vmatpush1.msra.mxu0 0.0
  %826 = vmatprep.subr.mxu0 0.0
  %827 = vmatpush1.msra.mxu0 0.0
  %828 = vmatprep.subr.mxu0 0.0
  %829 = vmatpush1.msra.mxu0 0.0
  %830 = vmatprep.subr.mxu0 0.0
  %831 = vmatpush1.msra.mxu0 0.0
  %832 = vmatprep.subr.mxu0 0.0
  %833 = vmatpush1.msra.mxu0 0.0
  %834 = vmatprep.subr.mxu0 0.0
  %835 = vmatpush1.msra.mxu0 0.0
  %836 = vmatprep.subr.mxu0 0.0
  %837 = vmatpush1.msra.mxu0 0.0
  %838 = vmatprep.subr.mxu0 0.0
  %839 = vmatpush1.msra.mxu0 0.0
  %840 = vmatprep.subr.mxu0 0.0
  %841 = vmatpush1.msra.mxu0 0.0
  %842 = vmatprep.subr.mxu0 0.0
  %843 = vmatpush1.msra.mxu0 0.0
  %844 = vmatprep.subr.mxu0 0.0
  %845 = vmatpush1.msra.mxu0 0.0
  %846 = vmatprep.subr.mxu0 0.0
  %847 = vmatpush1.msra.mxu0 0.0
  %848 = vmatprep.subr.mxu0 0.0
  %849 = vmatpush1.msra.mxu0 0.0
  %850 = vmatprep.subr.mxu0 0.0
  %851 = vmatpush1.msra.mxu0 0.0
  %852 = vmatprep.subr.mxu0 0.0
  %853 = vmatpush1.msra.mxu0 0.0
  %854 = vmatprep.subr.mxu0 0.0
  %855 = vmatpush1.msra.mxu0 0.0
  %856 = vmatprep.subr.mxu0 0.0
  %857 = vmatpush1.msra.mxu0 0.0
  %858 = vmatprep.subr.mxu0 0.0
  %859 = vmatpush1.msra.mxu0 0.0
  %860 = vmatprep.subr.mxu0 0.0
  %861 = vmatpush1.msra.mxu0 0.0
  %862 = vmatprep.subr.mxu0 0.0
  %863 = vmatpush1.msra.mxu0 0.0
  %864 = vmatprep.subr.mxu0 0.0
  %865 = vmatpush1.msra.mxu0 0.0
  %866 = vmatprep.subr.mxu0 0.0
  %867 = vmatpush1.msra.mxu0 0.0
  %868 = vmatprep.mubr.f32.mxu0 0.0
  %869 = vmatmul.mubr.f32.gmra.mrb[0].mxu0 %v799
  %v870 = vpop.f32.mrb[0].mxu0
  %v871 = vadd.f32 %v797, %v870
  %v872 = vpop.f32.mrb[0].mxu0
  %873 = vmatprep.mubr.f32.mxu0 0.0
  %874 = vmatmul.mubr.f32.gmra.mrb[0].mxu0 %v802
  %v875 = vpop.f32.mrb[0].mxu0
  %v876 = vadd.f32 %v797, %v875
  %v877 = vpop.f32.mrb[0].mxu0
  %878 = vdwg.mxu0
  %vm879 = vcmask 31744
  %v880 = vsel %vm879, %v871, -inf
  %881 = vmax.xlane.f32.xlu0 %v880
  %v882 = vpop.xlane.xlu0 %881
  %v883 = vsub.f32 %v871, %v882
  %v884 = vmul.f32 %v883, 1.442695
  %v885 = vpow.pop %v884
  %v886 = vsel %vm879, %v885, 0.0
  %887 = vadd.xlane.f32.xlu0 %v886
  %v888 = vpop.xlane.xlu0 %887
  %v889 = vrcp.pop %v888
  %v890 = vmul.f32 %v885, %v889
  %v891 = vxor.u32 %v876, 2147483648
  %v892 = vmul.f32 %v891, 1.442695
  %v893 = vpow.pop %v892
  %v894 = vadd.f32 %v893, 1.0
  %v895 = vrcp.pop %v894
  %v896 = vmul.f32 1.0, %v895
  %897 = vst.msk [vmem:[%s6] sm:$0xff] %vm34, %v793
  %898 = vst.msk [vmem:[%s6 + $0x8] sm:$0xff] %vm34, %v122
  %899 = vst.msk [vmem:[%s6 + $0x10] sm:$0xff] %vm34, %v123
  %900 = vst.msk [vmem:[%s6 + $0x18] sm:$0xff] %vm34, %v124
  %901 = vst.msk [vmem:[%s6 + $0x20] sm:$0xff] %vm34, %v125
  %902 = vst.msk [vmem:[%s6 + $0x28] sm:$0xff] %vm34, %v107
  %903 = vst.msk [vmem:[%s6 + $0x30] sm:$0xff] %vm34, %v109
  %904 = vst.msk [vmem:[%s6 + $0x38] sm:$0xff] %vm34, %v111
  %905 = vst.msk [vmem:[%s6 + $0x40] sm:$0xff] %vm34, %v113
  %906 = vst.msk [vmem:[%s7] sm:$0xff] %vm879, %v871
  %907 = vst.msk [vmem:[%s7 + $0x8] sm:$0xff] %vm879, %v890
  %908 = vst.msk [vmem:[%s7 + $0x10] sm:$0xff] %vm879, %v896
  // Predicated region
  $region26: #{soft_forward.1} parent=0 // pred_check
    _
  $region27: #{soft_forward.1} parent=0 // pred_check_branch
    %910 = sbr.rel (0) target = $region29
  $region28: #{soft_forward.1} parent=0 // pred_region
    _
  $region29: #{soft_forward.1} parent=0 // pred_fallthru
    _
  // Predicated region
  $region30: #{soft_forward.1} parent=0 // pred_check
    _
  $region31: #{soft_forward.1} parent=0 // pred_check_branch
    %912 = sbr.rel (0) target = $region33
  $region32: #{soft_forward.1} parent=0 // pred_region
    _
  $region33: #{soft_forward.1} parent=0 // pred_fallthru
    _
  // Predicated region
  $region34: #{soft_forward.1} parent=0 // pred_check
    _
  $region35: #{soft_forward.1} parent=0 // pred_check_branch
    %914 = sbr.rel (0) target = $region37
  $region36: #{soft_forward.1} parent=0 // pred_region
    _
  $region37: #{soft_forward.1} parent=0 // pred_fallthru
    _
  // Predicated region
  $region38: #{soft_forward.1} parent=0 // pred_check
    _
  $region39: #{soft_forward.1} parent=0 // pred_check_branch
    %916 = sbr.rel (0) target = $region41
  $region40: #{soft_forward.1} parent=0 // pred_region
    _
  $region41: #{soft_forward.1} parent=0 // pred_fallthru
    _

</llo_original>
